<compile_context>
chip_gen: v7x
topology: tpu7x:2x2x1
jax: 0.10.0
libtpu: 0.0.40
codegen_flags: <defaults>
</compile_context>

<pallas_src>
import jax
import jax.numpy as jnp
from jax.experimental import pallas as pl
from jax.experimental.pallas import tpu as pltpu


def _round_up(x, m):
    return ((x + m - 1) // m) * m


def _time_embedding_kernel(x_ref, w1t_ref, b1_ref, w2t_ref, b2_ref, o_ref):
    # First linear: (tm, t_pad) @ (t_pad, e_pad), bf16 operands, f32 accumulate.
    h = jnp.dot(x_ref[...], w1t_ref[...], preferred_element_type=jnp.float32)
    h = h + b1_ref[...]
    # SiLU in f32: x * sigmoid(x). (sigmoid goes to the EUP slot; f32 kept for
    # v5e portability and exactness -- bf16 EUP on v6e/v7x is a further option.)
    h = h * jax.nn.sigmoid(h)
    # Second linear: cast activations back to the MXU dtype, f32 accumulate.
    out = jnp.dot(h.astype(w2t_ref.dtype), w2t_ref[...],
                  preferred_element_type=jnp.float32)
    out = out + b2_ref[...]
    o_ref[...] = out.astype(o_ref.dtype)


def prepare_time_embedding_params(w1, b1, w2, b2, *, compute_dtype=jnp.bfloat16):
    """One-time weight preprocessing (do at model load, NOT per forward call).

    w1: (e_dim, t_dim), b1: (e_dim,), w2: (e_dim, e_dim), b2: (e_dim,)
    Returns padded, pre-transposed, compute-dtype weights + metadata.
    """
    e_dim, t_dim = w1.shape
    t_pad = _round_up(t_dim, 128)
    e_pad = _round_up(e_dim, 128)

    w1t = jnp.pad(w1.T.astype(compute_dtype),
                  ((0, t_pad - t_dim), (0, e_pad - e_dim)))
    w2t = jnp.pad(w2.T.astype(compute_dtype),
                  ((0, e_pad - e_dim), (0, e_pad - e_dim)))
    b1p = jnp.pad(b1.astype(jnp.float32).reshape(1, e_dim),
                  ((0, 0), (0, e_pad - e_dim)))
    b2p = jnp.pad(b2.astype(jnp.float32).reshape(1, e_dim),
                  ((0, 0), (0, e_pad - e_dim)))
    return {
        "w1t": w1t, "b1": b1p, "w2t": w2t, "b2": b2p,
        "t_dim": t_dim, "e_dim": e_dim, "t_pad": t_pad, "e_pad": e_pad,
        "compute_dtype": compute_dtype,
    }


def time_embedding_1d(t, params, *, block_b=256):
    """Forward pass of TimeEmbedding1D on pre-prepared params.

    t: timestamp tensor; size-1 dims are squeezed (mirrors torch .squeeze()),
       last remaining dim must equal t_dim.
    returns: (..., e_dim) with the same leading (batch) structure as squeeze(t)
    """
    t_dim, e_dim = params["t_dim"], params["e_dim"]
    t_pad, e_pad = params["t_pad"], params["e_pad"]
    cdt = params["compute_dtype"]
    out_dtype = t.dtype

    # Mirror torch .squeeze(): drop ALL size-1 dims; infer the feature dim from
    # the weights so a fully-squeezed tensor is never misinterpreted.
    x = jnp.squeeze(t)
    single = (x.ndim == 1)
    x2 = x.reshape(1, t_dim) if single else x.reshape(-1, t_dim)
    B = x2.shape[0]

    # Batch tile: aim for >= 2 grid tiles when B allows (feeds both v7x TCs),
    # capped at block_b, 8-aligned.
    tm = min(block_b, _round_up(max(-(-B // 2), 1), 8))
    b_pad = _round_up(B, tm)
    grid = (b_pad // tm,)

    # Activations only: pad batch + feature and cast to the MXU dtype (cheap;
    # the heavy weight padding/casting lives in prepare_time_embedding_params).
    x_p = jnp.pad(x2.astype(cdt), ((0, b_pad - B), (0, t_pad - t_dim)))

    w1t, b1p, w2t, b2p = params["w1t"], params["b1"], params["w2t"], params["b2"]

    cost = pl.CostEstimate(
        flops=2 * b_pad * (t_pad * e_pad + e_pad * e_pad),
        transcendentals=b_pad * e_pad,
        bytes_accessed=(x_p.size * x_p.dtype.itemsize
                        + w1t.size * w1t.dtype.itemsize
                        + w2t.size * w2t.dtype.itemsize
                        + (b1p.size + b2p.size) * 4
                        + b_pad * e_pad * jnp.dtype(out_dtype).itemsize),
    )

    resident = lambda i: (0, 0)   # grid-constant blocks (weights / biases)

    out_p = pl.pallas_call(
        _time_embedding_kernel,
        out_shape=jax.ShapeDtypeStruct((b_pad, e_pad), out_dtype),
        grid=grid,
        in_specs=[
            # activations: tiled over batch, default double-buffered pipeline
            pl.BlockSpec((tm, t_pad), lambda i: (i, 0)),
            # W1^T, b1, W2^T, b2: VMEM-resident across the whole grid ->
            # single-buffered to halve their VMEM footprint.
            pl.BlockSpec((t_pad, e_pad), resident, pipeline_mode=pl.Buffered(1)),
            pl.BlockSpec((1, e_pad), resident, pipeline_mode=pl.Buffered(1)),
            pl.BlockSpec((e_pad, e_pad), resident, pipeline_mode=pl.Buffered(1)),
            pl.BlockSpec((1, e_pad), resident, pipeline_mode=pl.Buffered(1)),
        ],
        out_specs=pl.BlockSpec((tm, e_pad), lambda i: (i, 0)),
        compiler_params=pltpu.CompilerParams(
            dimension_semantics=("parallel",),   # shard batch tiles across v7x TCs
            vmem_limit_bytes=32 * 1024 * 1024,   # > v5e's 16 MiB default, <= all physical
        ),
        cost_estimate=cost,
    )(x_p, w1t, b1p, w2t, b2p)

    out = out_p[:B, :e_dim]
    if single:
        out = out[0]
    return out


def _reference_f32(t, w1, b1, w2, b2):
    x = jnp.squeeze(t)
    h = x @ w1.T + b1
    h = h * jax.nn.sigmoid(h)
    return h @ w2.T + b2


def _reference_bf16(t, w1, b1, w2, b2):
    # Same numerics as the kernel: bf16 matmul inputs, f32 accumulation,
    # f32 bias + SiLU.
    bf = jnp.bfloat16
    x = jnp.squeeze(t).astype(bf)
    h = jnp.dot(x, w1.T.astype(bf), preferred_element_type=jnp.float32) + b1
    h = h * jax.nn.sigmoid(h)
    return jnp.dot(h.astype(bf), w2.T.astype(bf),
                   preferred_element_type=jnp.float32) + b2


if __name__ == "__main__":
    key = jax.random.PRNGKey(0)
    k_t, k_w1, k_b1, k_w2, k_b2 = jax.random.split(key, 5)

    B, t_dim, e_dim = 8, 8, 32

    # Input timestamp batch with a size-1 dim to exercise .squeeze()
    t = jax.random.normal(k_t, (B, 1, t_dim), dtype=jnp.float32)

    # Deterministic synthetic parameters (PyTorch nn.Linear shapes)
    w1 = jax.random.normal(k_w1, (e_dim, t_dim), dtype=jnp.float32) * 0.1
    b1 = jax.random.normal(k_b1, (e_dim,), dtype=jnp.float32) * 0.1
    w2 = jax.random.normal(k_w2, (e_dim, e_dim), dtype=jnp.float32) * 0.1
    b2 = jax.random.normal(k_b2, (e_dim,), dtype=jnp.float32) * 0.1

    # One-time weight prep (pad / transpose / bf16-cast), then forward.
    params = prepare_time_embedding_params(w1, b1, w2, b2)
    out = jax.block_until_ready(time_embedding_1d(t, params))

    ref_bf16 = _reference_bf16(t, w1, b1, w2, b2)   # same-precision reference
    ref_f32 = _reference_f32(t, w1, b1, w2, b2)     # full-precision sanity check

    assert out.shape == (B, e_dim), out.shape
    assert jnp.allclose(out, ref_bf16, atol=1e-4, rtol=1e-4), "mismatch vs bf16 reference"
    assert jnp.allclose(out, ref_f32, atol=3e-2, rtol=3e-2), "mismatch vs f32 reference"

    print("KERNEL_OK")
</pallas_src>

<mosaic_0001>
module attributes {stable_mosaic.version = 11 : i64} {
  func.func @_time_embedding_kernel(%arg0: i32, %arg1: memref<8x128xbf16, #tpu.memory_space<vmem>>, %arg2: memref<128x128xbf16, #tpu.memory_space<vmem>>, %arg3: memref<1x128xf32, #tpu.memory_space<vmem>>, %arg4: memref<128x128xbf16, #tpu.memory_space<vmem>>, %arg5: memref<1x128xf32, #tpu.memory_space<vmem>>, %arg6: memref<8x128xf32, #tpu.memory_space<vmem>>) attributes {dimension_semantics = [#tpu.dimension_semantics<parallel>], iteration_bounds = array<i64: 1>, scalar_prefetch = 0 : i64, scratch_operands = 0 : i64, tpu.core_type = #tpu.core_type<tc>, window_params = [{transform_indices = @transform_0, window_bounds = array<i64: 8, 128>}, {pipeline_mode = #tpu.pipeline_mode<synchronous>, transform_indices = @transform_1, window_bounds = array<i64: 128, 128>}, {pipeline_mode = #tpu.pipeline_mode<synchronous>, transform_indices = @transform_2, window_bounds = array<i64: 1, 128>}, {pipeline_mode = #tpu.pipeline_mode<synchronous>, transform_indices = @transform_3, window_bounds = array<i64: 128, 128>}, {pipeline_mode = #tpu.pipeline_mode<synchronous>, transform_indices = @transform_4, window_bounds = array<i64: 1, 128>}, {transform_indices = @transform_5, window_bounds = array<i64: 8, 128>}]} {
    %c0 = arith.constant 0 : index
    %c0_0 = arith.constant 0 : index
    %0 = vector.load %arg1[%c0, %c0_0] : memref<8x128xbf16, #tpu.memory_space<vmem>>, vector<8x128xbf16>
    %c0_1 = arith.constant 0 : index
    %c0_2 = arith.constant 0 : index
    %1 = vector.load %arg2[%c0_1, %c0_2] : memref<128x128xbf16, #tpu.memory_space<vmem>>, vector<128x128xbf16>
    %cst = arith.constant dense<0.000000e+00> : vector<8x128xf32>
    %2 = tpu.matmul %0, %1, %cst {dimension_numbers = #tpu.dot_dimension_numbers<[1], [0], [0], [1], [0, 0, 1, 1], [], []>} : vector<8x128xbf16>, vector<128x128xbf16>, vector<8x128xf32> -> vector<8x128xf32>
    %c0_3 = arith.constant 0 : index
    %c0_4 = arith.constant 0 : index
    %3 = vector.load %arg3[%c0_3, %c0_4] : memref<1x128xf32, #tpu.memory_space<vmem>>, vector<1x128xf32>
    %4 = vector.broadcast %3 : vector<1x128xf32> to vector<8x128xf32>
    %5 = arith.addf %2, %4 : vector<8x128xf32>
    %6 = arith.negf %5 : vector<8x128xf32>
    %7 = math.exp %6 : vector<8x128xf32>
    %cst_5 = arith.constant 1.000000e+00 : f32
    %8 = vector.broadcast %cst_5 : f32 to vector<8x128xf32>
    %9 = arith.addf %8, %7 : vector<8x128xf32>
    %10 = arith.divf %8, %9 : vector<8x128xf32>
    %11 = arith.mulf %5, %10 : vector<8x128xf32>
    %12 = arith.truncf %11 : vector<8x128xf32> to vector<8x128xbf16>
    %c0_6 = arith.constant 0 : index
    %c0_7 = arith.constant 0 : index
    %13 = vector.load %arg4[%c0_6, %c0_7] : memref<128x128xbf16, #tpu.memory_space<vmem>>, vector<128x128xbf16>
    %cst_8 = arith.constant dense<0.000000e+00> : vector<8x128xf32>
    %14 = tpu.matmul %12, %13, %cst_8 {dimension_numbers = #tpu.dot_dimension_numbers<[1], [0], [0], [1], [0, 0, 1, 1], [], []>} : vector<8x128xbf16>, vector<128x128xbf16>, vector<8x128xf32> -> vector<8x128xf32>
    %c0_9 = arith.constant 0 : index
    %c0_10 = arith.constant 0 : index
    %15 = vector.load %arg5[%c0_9, %c0_10] : memref<1x128xf32, #tpu.memory_space<vmem>>, vector<1x128xf32>
    %16 = vector.broadcast %15 : vector<1x128xf32> to vector<8x128xf32>
    %17 = arith.addf %14, %16 : vector<8x128xf32>
    %c0_11 = arith.constant 0 : index
    %c0_12 = arith.constant 0 : index
    %18 = vector.load %arg6[%c0_11, %c0_12] : memref<8x128xf32, #tpu.memory_space<vmem>>, vector<8x128xf32>
    tpu.vector_store %arg6[%c0_11, %c0_12], %17 {strides = array<i32>} : memref<8x128xf32, #tpu.memory_space<vmem>>, vector<8x128xf32>,
    return
  }
  func.func @transform_0(%arg0: i32) -> (i32, i32) {
    %c0_i32 = arith.constant 0 : i32
    %c0_i32_0 = arith.constant 0 : i32
    return %arg0, %c0_i32 : i32, i32
  }
  func.func @transform_1(%arg0: i32) -> (i32, i32) {
    %c0_i32 = arith.constant 0 : i32
    %c0_i32_0 = arith.constant 0 : i32
    %c0_i32_1 = arith.constant 0 : i32
    return %c0_i32, %c0_i32_0 : i32, i32
  }
  func.func @transform_2(%arg0: i32) -> (i32, i32) {
    %c0_i32 = arith.constant 0 : i32
    %c0_i32_0 = arith.constant 0 : i32
    %c0_i32_1 = arith.constant 0 : i32
    return %c0_i32, %c0_i32_0 : i32, i32
  }
  func.func @transform_3(%arg0: i32) -> (i32, i32) {
    %c0_i32 = arith.constant 0 : i32
    %c0_i32_0 = arith.constant 0 : i32
    %c0_i32_1 = arith.constant 0 : i32
    return %c0_i32, %c0_i32_0 : i32, i32
  }
  func.func @transform_4(%arg0: i32) -> (i32, i32) {
    %c0_i32 = arith.constant 0 : i32
    %c0_i32_0 = arith.constant 0 : i32
    %c0_i32_1 = arith.constant 0 : i32
    return %c0_i32, %c0_i32_0 : i32, i32
  }
  func.func @transform_5(%arg0: i32) -> (i32, i32) {
    %c0_i32 = arith.constant 0 : i32
    %c0_i32_0 = arith.constant 0 : i32
    return %arg0, %c0_i32 : i32, i32
  }
}

</mosaic_0001>

<llo_original>
// kernel: tpu_custom_call.1
$region0: #{tpu_custom_call.1}
  #allocation0 [shape = 'u32[]', space=smem, size = 0x4, offset = 0x4, fixed_abs, tag = 'smem constant byte address 0x4 - core index']
  #allocation1 [shape = 'u32[144,128]{1,0:T(1,128)}', space=vmem, size = 0x12000, scoped, tag = 'internal scratch']
  %s0 = inlined_call_operand.hbm [shape: bf16[8,128], index: 0, kind: input, shape index: {}]
  %s1 = inlined_call_operand.hbm [shape: bf16[128,128], index: 1, kind: input, shape index: {}]
  %s2 = inlined_call_operand.vmem [shape: f32[1,128], index: 2, kind: input, shape index: {}]
  %s3 = inlined_call_operand.hbm [shape: bf16[128,128], index: 3, kind: input, shape index: {}]
  %s4 = inlined_call_operand.vmem [shape: f32[1,128], index: 4, kind: input, shape index: {}]
  %s5 = inlined_call_operand.hbm [shape: f32[8,128], index: 5, kind: output, shape index: {}]
  %s6 = sld [smem:[#allocation0]]
  $region42: #{tpu_custom_call.1} parent=0
    _
  %s8 = ssub.s32 1, %s6
  %s9 = scalar_select 0, %s8, %s6
  $region1: #{tpu_custom_call.1} parent=0
    #allocation2 [shape = 'u8[2048]{0}', space=vmem, size = 0x800, scoped, tag = 'input window, operand 0, single buffered']
    #allocation3 [shape = 's32[1]{0}', space=sflag, size = 0x4, scoped, tag = 'scoped memory for tpu_custom_call.1']
    #allocation4 [shape = 's32[1]{0}', space=sflag, size = 0x4, scoped, tag = 'scoped memory for tpu_custom_call.1']
    #allocation5 [shape = 'u8[32768]{0}', space=vmem, size = 0x8000, scoped, tag = 'input window, operand 1, single buffered']
    #allocation6 [shape = 's32[1]{0}', space=sflag, size = 0x4, scoped, tag = 'scoped memory for tpu_custom_call.1']
    #allocation7 [shape = 'u8[32768]{0}', space=vmem, size = 0x8000, scoped, tag = 'input window, operand 3, single buffered']
    #allocation8 [shape = 'u8[4096]{0}', space=vmem, size = 0x1000, scoped, tag = 'output window, operand 0, single buffered']
    %10 = vsyncpa [#allocation3], 0
    %11 = vsyncpa [#allocation6], 0
    %12 = vsyncpa [#allocation4], 0
    // Predicated region
    $region2: #{tpu_custom_call.1} parent=1 // pred_check
      _
    $region3: #{tpu_custom_call.1} parent=1 // pred_check_branch
      %14 = sbr.rel (0) target = $region5
    $region4: #{tpu_custom_call.1} parent=1 // pred_region
      %s16 = ssub.s32 64, 64
      %17 = vsyncadd [#allocation3], %s16
      %s19 = sshll.u32 [#allocation2], 4
      %s20 = int_to_ptr.vmem [resolvable:$true] %s19
      %22 = dma.hbm_to_vmem [thread:$0]  %s0, 64, %s20, [#allocation3]
    $region5: #{tpu_custom_call.1} parent=1 // pred_fallthru
      _
    // Predicated region
    $region6: #{tpu_custom_call.1} parent=1 // pred_check
      _
    $region7: #{tpu_custom_call.1} parent=1 // pred_check_branch
      %24 = sbr.rel (0) target = $region9
    $region8: #{tpu_custom_call.1} parent=1 // pred_region
      %s26 = ssub.s32 1024, 1024
      %27 = vsyncadd [#allocation6], %s26
      %s28 = sshll.u32 [#allocation5], 4
      %s29 = int_to_ptr.vmem [resolvable:$true] %s28
      %34 = dma.hbm_to_vmem [thread:$0]  %s1, 1024, %s29, [#allocation6], 64, 64, 4
    $region9: #{tpu_custom_call.1} parent=1 // pred_fallthru
      _
    // Predicated region
    $region10: #{tpu_custom_call.1} parent=1 // pred_check
      _
    $region11: #{tpu_custom_call.1} parent=1 // pred_check_branch
      %36 = sbr.rel (0) target = $region13
    $region12: #{tpu_custom_call.1} parent=1 // pred_region
      _
    $region13: #{tpu_custom_call.1} parent=1 // pred_fallthru
      _
    // Predicated region
    $region14: #{tpu_custom_call.1} parent=1 // pred_check
      _
    $region15: #{tpu_custom_call.1} parent=1 // pred_check_branch
      %38 = sbr.rel (0) target = $region17
    $region16: #{tpu_custom_call.1} parent=1 // pred_region
      %s40 = ssub.s32 1024, 1024
      %41 = vsyncadd [#allocation6], %s40
      %s42 = sshll.u32 [#allocation7], 4
      %s43 = int_to_ptr.vmem [resolvable:$true] %s42
      %48 = dma.hbm_to_vmem [thread:$0]  %s3, 1024, %s43, [#allocation6], 64, 64, 4
    $region17: #{tpu_custom_call.1} parent=1 // pred_fallthru
      _
    // Predicated region
    $region18: #{tpu_custom_call.1} parent=1 // pred_check
      _
    $region19: #{tpu_custom_call.1} parent=1 // pred_check_branch
      %50 = sbr.rel (0) target = $region21
    $region20: #{tpu_custom_call.1} parent=1 // pred_region
      _
    $region21: #{tpu_custom_call.1} parent=1 // pred_fallthru
      _
    // Predicated region
    $region22: #{tpu_custom_call.1} parent=1 // pred_check
      _
    $region23: #{tpu_custom_call.1} parent=1 // pred_check_branch
      %52 = sbr.rel (0) target = $region25
    $region24: #{tpu_custom_call.1} parent=1 // pred_region
      %53 = dma.done [#allocation3], 64
    $region25: #{tpu_custom_call.1} parent=1 // pred_fallthru
      _
    // Predicated region
    $region26: #{tpu_custom_call.1} parent=1 // pred_check
      _
    $region27: #{tpu_custom_call.1} parent=1 // pred_check_branch
      %55 = sbr.rel (0) target = $region29
    $region28: #{tpu_custom_call.1} parent=1 // pred_region
      %56 = dma.done [#allocation6], 1024
    $region29: #{tpu_custom_call.1} parent=1 // pred_fallthru
      _
    // Predicated region
    $region30: #{tpu_custom_call.1} parent=1 // pred_check
      _
    $region31: #{tpu_custom_call.1} parent=1 // pred_check_branch
      %58 = sbr.rel (0) target = $region33
    $region32: #{tpu_custom_call.1} parent=1 // pred_region
      %59 = dma.done [#allocation6], 1024
    $region33: #{tpu_custom_call.1} parent=1 // pred_fallthru
      _
    %v61 = vld [vmem:[#allocation2] sm:$0xf]
    %v62 = vld [vmem:[#allocation5] sm:$0xf]
    %v63 = vld [vmem:[#allocation5 + $0x4] sm:$0xf]
    %v64 = vld [vmem:[#allocation5 + $0x8] sm:$0xf]
    %v65 = vld [vmem:[#allocation5 + $0xc] sm:$0xf]
    %v66 = vld [vmem:[#allocation5 + $0x10] sm:$0xf]
    %v67 = vld [vmem:[#allocation5 + $0x14] sm:$0xf]
    %v68 = vld [vmem:[#allocation5 + $0x18] sm:$0xf]
    %v69 = vld [vmem:[#allocation5 + $0x1c] sm:$0xf]
    %v70 = vld [vmem:[#allocation5 + $0x20] sm:$0xf]
    %v71 = vld [vmem:[#allocation5 + $0x24] sm:$0xf]
    %v72 = vld [vmem:[#allocation5 + $0x28] sm:$0xf]
    %v73 = vld [vmem:[#allocation5 + $0x2c] sm:$0xf]
    %v74 = vld [vmem:[#allocation5 + $0x30] sm:$0xf]
    %v75 = vld [vmem:[#allocation5 + $0x34] sm:$0xf]
    %v76 = vld [vmem:[#allocation5 + $0x38] sm:$0xf]
    %v77 = vld [vmem:[#allocation5 + $0x3c] sm:$0xf]
    %v78 = vld [vmem:[%s2] sm:$0x1]
    %v80 = vlaneseq
    %v81 = vshrl.u32 %v80, 7
    %v82 = vsub.s32 0, %v81
    %v83 = vrot.slane %v78, %v82
    %v101 = vunpack.c.l.b16 %v62
    %v102 = vunpack.c.l.b16 %v63
    %v103 = vunpack.c.l.b16 %v64
    %v104 = vunpack.c.l.b16 %v65
    %v105 = vunpack.c.l.b16 %v66
    %v106 = vunpack.c.l.b16 %v67
    %v107 = vunpack.c.l.b16 %v68
    %v108 = vunpack.c.l.b16 %v69
    %v109 = vunpack.c.l.b16 %v70
    %v110 = vunpack.c.l.b16 %v71
    %v111 = vunpack.c.l.b16 %v72
    %v112 = vunpack.c.l.b16 %v73
    %v113 = vunpack.c.l.b16 %v74
    %v114 = vunpack.c.l.b16 %v75
    %v115 = vunpack.c.l.b16 %v76
    %v116 = vunpack.c.l.b16 %v77
    %v117 = vpack.c.b16 %v102, %v101
    %v118 = vpack.c.b16 %v104, %v103
    %v119 = vpack.c.b16 %v106, %v105
    %v120 = vpack.c.b16 %v108, %v107
    %v121 = vpack.c.b16 %v110, %v109
    %v122 = vpack.c.b16 %v112, %v111
    %v123 = vpack.c.b16 %v114, %v113
    %v124 = vpack.c.b16 %v116, %v115
    %133 = vmatprep.subr.bf16.mxu0 0
    %134 = vmatpush1.bf16.msra.mxu0 %v117
    %135 = vmatprep.subr.bf16.mxu0 0
    %136 = vmatpush1.bf16.msra.mxu0 %v118
    %137 = vmatprep.subr.bf16.mxu0 0
    %138 = vmatpush1.bf16.msra.mxu0 %v119
    %139 = vmatprep.subr.bf16.mxu0 0
    %140 = vmatpush1.bf16.msra.mxu0 %v120
    %141 = vmatprep.subr.bf16.mxu0 0
    %142 = vmatpush1.bf16.msra.mxu0 %v121
    %143 = vmatprep.subr.bf16.mxu0 0
    %144 = vmatpush1.bf16.msra.mxu0 %v122
    %145 = vmatprep.subr.bf16.mxu0 0
    %146 = vmatpush1.bf16.msra.mxu0 %v123
    %147 = vmatprep.subr.bf16.mxu0 0
    %148 = vmatpush1.bf16.msra.mxu0 %v124
    %149 = vmatprep.subr.bf16.mxu0 0
    %150 = vmatpush1.bf16.msra.mxu0 0
    %151 = vmatprep.subr.bf16.mxu0 0
    %152 = vmatpush1.bf16.msra.mxu0 0
    %153 = vmatprep.subr.bf16.mxu0 0
    %154 = vmatpush1.bf16.msra.mxu0 0
    %155 = vmatprep.subr.bf16.mxu0 0
    %156 = vmatpush1.bf16.msra.mxu0 0
    %157 = vmatprep.subr.bf16.mxu0 0
    %158 = vmatpush1.bf16.msra.mxu0 0
    %159 = vmatprep.subr.bf16.mxu0 0
    %160 = vmatpush1.bf16.msra.mxu0 0
    %161 = vmatprep.subr.bf16.mxu0 0
    %162 = vmatpush1.bf16.msra.mxu0 0
    %163 = vmatprep.subr.bf16.mxu0 0
    %164 = vmatpush1.bf16.msra.mxu0 0
    %165 = vmatprep.mubr.bf16.mxu0 0
    %166 = vmatmul.mubr.bf16.gmra.mrb[0].mxu0 %v61
    %v167 = vpop.f32.mrb[0].mxu0
    %v168 = vadd.f32 %v83, %v167
    %v169 = vpop.f32.mrb[0].mxu0
    %v170 = vpop.f32.mrb[0].mxu0
    %v171 = vpop.f32.mrb[0].mxu0
    %172 = vdwg.mxu0
    %v173 = vxor.u32 %v168, 2147483648
    %v174 = vmul.f32 %v173, 1.442695
    %v175 = vpow.pop %v174
    %v176 = vadd.f32 %v175, 1.0
    %v177 = vrcp.pop %v176
    %v178 = vmul.f32 1.0, %v177
    %v179 = vmul.f32 %v168, %v178
    %v180 = vpack.c.bf16 %v179, %v179
    %v181 = vld [vmem:[#allocation7] sm:$0xf]
    %v182 = vld [vmem:[#allocation7 + $0x4] sm:$0xf]
    %v183 = vld [vmem:[#allocation7 + $0x8] sm:$0xf]
    %v184 = vld [vmem:[#allocation7 + $0xc] sm:$0xf]
    %v185 = vld [vmem:[#allocation7 + $0x10] sm:$0xf]
    %v186 = vld [vmem:[#allocation7 + $0x14] sm:$0xf]
    %v187 = vld [vmem:[#allocation7 + $0x18] sm:$0xf]
    %v188 = vld [vmem:[#allocation7 + $0x1c] sm:$0xf]
    %v189 = vld [vmem:[#allocation7 + $0x20] sm:$0xf]
    %v190 = vld [vmem:[#allocation7 + $0x24] sm:$0xf]
    %v191 = vld [vmem:[#allocation7 + $0x28] sm:$0xf]
    %v192 = vld [vmem:[#allocation7 + $0x2c] sm:$0xf]
    %v193 = vld [vmem:[#allocation7 + $0x30] sm:$0xf]
    %v194 = vld [vmem:[#allocation7 + $0x34] sm:$0xf]
    %v195 = vld [vmem:[#allocation7 + $0x38] sm:$0xf]
    %v196 = vld [vmem:[#allocation7 + $0x3c] sm:$0xf]
    %v197 = vld [vmem:[%s4] sm:$0x1]
    %v199 = vlaneseq
    %v200 = vshrl.u32 %v199, 7
    %v201 = vsub.s32 0, %v200
    %v202 = vrot.slane %v197, %v201
    %v220 = vunpack.c.l.b16 %v181
    %v221 = vunpack.c.l.b16 %v182
    %v222 = vunpack.c.l.b16 %v183
    %v223 = vunpack.c.l.b16 %v184
    %v224 = vunpack.c.l.b16 %v185
    %v225 = vunpack.c.l.b16 %v186
    %v226 = vunpack.c.l.b16 %v187
    %v227 = vunpack.c.l.b16 %v188
    %v228 = vunpack.c.l.b16 %v189
    %v229 = vunpack.c.l.b16 %v190
    %v230 = vunpack.c.l.b16 %v191
    %v231 = vunpack.c.l.b16 %v192
    %v232 = vunpack.c.l.b16 %v193
    %v233 = vunpack.c.l.b16 %v194
    %v234 = vunpack.c.l.b16 %v195
    %v235 = vunpack.c.l.b16 %v196
    %v236 = vpack.c.b16 %v221, %v220
    %v237 = vpack.c.b16 %v223, %v222
    %v238 = vpack.c.b16 %v225, %v224
    %v239 = vpack.c.b16 %v227, %v226
    %v240 = vpack.c.b16 %v229, %v228
    %v241 = vpack.c.b16 %v231, %v230
    %v242 = vpack.c.b16 %v233, %v232
    %v243 = vpack.c.b16 %v235, %v234
    %252 = vmatprep.subr.bf16.mxu0 0
    %253 = vmatpush1.bf16.msra.mxu0 %v236
    %254 = vmatprep.subr.bf16.mxu0 0
    %255 = vmatpush1.bf16.msra.mxu0 %v237
    %256 = vmatprep.subr.bf16.mxu0 0
    %257 = vmatpush1.bf16.msra.mxu0 %v238
    %258 = vmatprep.subr.bf16.mxu0 0
    %259 = vmatpush1.bf16.msra.mxu0 %v239
    %260 = vmatprep.subr.bf16.mxu0 0
    %261 = vmatpush1.bf16.msra.mxu0 %v240
    %262 = vmatprep.subr.bf16.mxu0 0
    %263 = vmatpush1.bf16.msra.mxu0 %v241
    %264 = vmatprep.subr.bf16.mxu0 0
    %265 = vmatpush1.bf16.msra.mxu0 %v242
    %266 = vmatprep.subr.bf16.mxu0 0
    %267 = vmatpush1.bf16.msra.mxu0 %v243
    %268 = vmatprep.subr.bf16.mxu0 0
    %269 = vmatpush1.bf16.msra.mxu0 0
    %270 = vmatprep.subr.bf16.mxu0 0
    %271 = vmatpush1.bf16.msra.mxu0 0
    %272 = vmatprep.subr.bf16.mxu0 0
    %273 = vmatpush1.bf16.msra.mxu0 0
    %274 = vmatprep.subr.bf16.mxu0 0
    %275 = vmatpush1.bf16.msra.mxu0 0
    %276 = vmatprep.subr.bf16.mxu0 0
    %277 = vmatpush1.bf16.msra.mxu0 0
    %278 = vmatprep.subr.bf16.mxu0 0
    %279 = vmatpush1.bf16.msra.mxu0 0
    %280 = vmatprep.subr.bf16.mxu0 0
    %281 = vmatpush1.bf16.msra.mxu0 0
    %282 = vmatprep.subr.bf16.mxu0 0
    %283 = vmatpush1.bf16.msra.mxu0 0
    %284 = vmatprep.mubr.bf16.mxu0 0
    %285 = vmatmul.mubr.bf16.gmra.mrb[0].mxu0 %v180
    %v286 = vpop.f32.mrb[0].mxu0
    %v287 = vadd.f32 %v202, %v286
    %v288 = vpop.f32.mrb[0].mxu0
    %v289 = vpop.f32.mrb[0].mxu0
    %v290 = vpop.f32.mrb[0].mxu0
    %291 = vdwg.mxu0
    %292 = vst [vmem:[#allocation8] sm:$0xff] %v287
    // Predicated region
    $region34: #{tpu_custom_call.1} parent=1 // pred_check
      _
    $region35: #{tpu_custom_call.1} parent=1 // pred_check_branch
      %294 = sbr.rel (0) target = $region37
    $region36: #{tpu_custom_call.1} parent=1 // pred_region
      %s296 = ssub.s32 128, 128
      %297 = vsyncadd [#allocation4], %s296
      %s299 = sshll.u32 [#allocation8], 4
      %s300 = int_to_ptr.vmem [resolvable:$true] %s299
      %302 = dma.vmem_to_hbm [thread:$0]  %s300, 128, %s5, [#allocation4]
    $region37: #{tpu_custom_call.1} parent=1 // pred_fallthru
      _
    // Predicated region
    $region38: #{tpu_custom_call.1} parent=1 // pred_check
      _
    $region39: #{tpu_custom_call.1} parent=1 // pred_check_branch
      %304 = sbr.rel (0) target = $region41
    $region40: #{tpu_custom_call.1} parent=1 // pred_region
      %305 = dma.done [#allocation4], 128
    $region41: #{tpu_custom_call.1} parent=1 // pred_fallthru
      _
    %306 = vsyncpa [#allocation3], 1
    %307 = vsyncpa [#allocation6], 1
    %308 = vsyncpa [#allocation4], 1

</llo_original>
